<compile_context>
chip_gen: v7x
topology: tpu7x:2x2x1
jax: 0.10.0
libtpu: 0.0.40
codegen_flags: <defaults>
</compile_context>

<pallas_src>
import functools

import jax
import jax.numpy as jnp
from jax.experimental import pallas as pl
from jax.experimental.pallas import tpu as pltpu


def _round_up(x, m):
    return (x + m - 1) // m * m


def _pick_tm(batch, n_patches, target):
    """Pick an M-tile size that divides B*N and keeps pos-emb indexing simple."""
    m = batch * n_patches
    if m <= target:
        return m
    # Tile covers whole batches (TM = bpt * N): pos is pre-tiled bpt times.
    for bpt in range(max(1, target // n_patches), 0, -1):
        if batch % bpt == 0 and (bpt * n_patches) % 8 == 0:
            return bpt * n_patches
    # Tile is a divisor of N: pos selected via modulo index_map.
    for tm in range(min(target, n_patches), 7, -1):
        if n_patches % tm == 0 and tm % 8 == 0:
            return tm
    return m  # fallback: single tile (block shape == full array dims)


def _vision_embed_kernel(patches_ref, w_ref, pos_ref, out_ref):
    # patches_ref: (TM, K_pad)    compute dtype (bf16 or f32)
    # w_ref:       (K_pad, E_pad) compute dtype
    # pos_ref:     (TM, E_pad)    f32, already includes the conv bias
    # out_ref:     (TM, E_pad)    f32
    acc = jnp.dot(patches_ref[...], w_ref[...],
                  preferred_element_type=jnp.float32)
    out_ref[...] = (acc + pos_ref[...]).astype(out_ref.dtype)


@functools.partial(jax.jit,
                   static_argnames=("patch_size", "compute_dtype", "tm_target"))
def vision_embedding(image, conv_w, conv_b, pos_emb, *, patch_size,
                     compute_dtype=jnp.bfloat16, tm_target=512):
    """image: (B, C, H, W); conv_w: (E, C, P, P); conv_b: (E,);
    pos_emb: (N, E) with N = (H//P)*(W//P).  Returns (B, N, E) f32."""
    B, C, H, W = image.shape
    P = patch_size
    E = conv_w.shape[0]
    Hp, Wp = H // P, W // P
    N = Hp * Wp
    K = C * P * P
    M = B * N
    assert conv_w.shape == (E, C, P, P)
    assert pos_emb.shape == (N, E)

    K_pad = _round_up(K, 128)
    E_pad = _round_up(E, 128)
    cbytes = jnp.dtype(compute_dtype).itemsize

    # --- layout glue (pure reshape/transpose, no FLOPs) ---
    # (B,C,Hp,P,Wp,P) -> (B,Hp,Wp,C,P,P) -> (M, K); row flatten order (c,p,q)
    # matches conv_w.reshape(E, K).
    # TODO(synk): for production shapes, fuse this im2col relayout into the
    # Pallas input DMA (strided in-kernel row copies) instead of materializing
    # the patch matrix in HBM.
    patches = image.reshape(B, C, Hp, P, Wp, P)
    patches = patches.transpose(0, 2, 4, 1, 3, 5).reshape(M, K)
    patches = jnp.pad(patches, ((0, 0), (0, K_pad - K))).astype(compute_dtype)

    w_flat = conv_w.reshape(E, K).T                                   # (K, E)
    w_flat = jnp.pad(w_flat, ((0, K_pad - K), (0, E_pad - E)))
    w_flat = w_flat.astype(compute_dtype)

    # Fold the conv bias into the position-embedding table (saves one VPU pass
    # and one input stream per grid step); keep in f32 for exactness.
    pos_b = pos_emb.astype(jnp.float32) + conv_b.astype(jnp.float32)[None, :]
    pos_b = jnp.pad(pos_b, ((0, 0), (0, E_pad - E)))                  # (N, E_pad)

    TM = _pick_tm(B, N, tm_target)
    assert M % TM == 0

    if TM % N == 0:
        # Each M-tile covers TM // N whole batches -> pre-tile pos per tile.
        pos_blk = jnp.tile(pos_b, (TM // N, 1)) if TM > N else pos_b
    else:
        # TM divides N -> pick the right pos slice with a modulo index_map.
        pos_blk = pos_b
    n_pos_tiles = pos_blk.shape[0] // TM
    if n_pos_tiles == 1:
        pos_index_map = lambda i: (0, 0)            # resident in VMEM
    else:
        pos_index_map = lambda i: (i % n_pos_tiles, 0)

    # VMEM budget: double-buffered input/output blocks + resident weight/pos.
    block_bytes = (2 * TM * K_pad * cbytes          # patches (double buffer)
                   + 2 * K_pad * E_pad * cbytes     # weight
                   + 2 * TM * E_pad * 4             # pos
                   + 2 * TM * E_pad * 4)            # output
    vmem_limit = min(64 * 1024 * 1024,
                     max(16 * 1024 * 1024, 2 * block_bytes))

    cost = pl.CostEstimate(
        flops=2 * M * K_pad * E_pad,
        transcendentals=0,
        bytes_accessed=(M * K_pad * cbytes + K_pad * E_pad * cbytes
                        + pos_blk.size * 4 + M * E_pad * 4),
    )

    out = pl.pallas_call(
        _vision_embed_kernel,
        out_shape=jax.ShapeDtypeStruct((M, E_pad), jnp.float32),
        grid_spec=pltpu.PrefetchScalarGridSpec(
            num_scalar_prefetch=0,
            grid=(M // TM,),
            in_specs=[
                pl.BlockSpec((TM, K_pad), lambda i: (i, 0)),
                pl.BlockSpec((K_pad, E_pad), lambda i: (0, 0)),
                pl.BlockSpec((TM, E_pad), pos_index_map),
            ],
            out_specs=pl.BlockSpec((TM, E_pad), lambda i: (i, 0)),
        ),
        compiler_params=pltpu.CompilerParams(
            dimension_semantics=("parallel",),
            vmem_limit_bytes=vmem_limit,
        ),
        cost_estimate=cost,
    )(patches, w_flat, pos_blk)

    if E_pad != E:
        out = out[:, :E]
    return out.reshape(B, N, E)


def reference(image, conv_w, conv_b, pos_emb, patch_size):
    """Pure-JAX reference mirroring the PyTorch forward."""
    patch_embeds = jax.lax.conv_general_dilated(
        image, conv_w,
        window_strides=(patch_size, patch_size),
        padding="VALID",
        dimension_numbers=("NCHW", "OIHW", "NCHW"),
    ) + conv_b[None, :, None, None]
    B, E, Hp, Wp = patch_embeds.shape
    emb = patch_embeds.reshape(B, E, Hp * Wp).transpose(0, 2, 1)      # (B, N, E)
    return emb + pos_emb[None]


if __name__ == "__main__":
    # Small shapes consistent with the module.
    image_size = 16
    patch_size = 4
    embed_dim = 32
    init_channel = 3
    batch = 2
    num_patches = (image_size // patch_size) ** 2                     # 16

    key = jax.random.PRNGKey(0)
    k_img, k_w, k_b, k_pos = jax.random.split(key, 4)

    image = jax.random.normal(
        k_img, (batch, init_channel, image_size, image_size), jnp.float32)
    conv_w = jax.random.normal(
        k_w, (embed_dim, init_channel, patch_size, patch_size),
        jnp.float32) * 0.02
    conv_b = jax.random.normal(k_b, (embed_dim,), jnp.float32) * 0.02
    pos_emb = jax.random.normal(
        k_pos, (num_patches, embed_dim), jnp.float32) * 0.02

    ref = reference(image, conv_w, conv_b, pos_emb, patch_size)

    # f32 compute path: tight check against the XLA conv reference.
    out_f32 = vision_embedding(image, conv_w, conv_b, pos_emb,
                               patch_size=patch_size,
                               compute_dtype=jnp.float32)
    out_f32 = jax.block_until_ready(out_f32)
    assert out_f32.shape == (batch, num_patches, embed_dim), out_f32.shape
    assert jnp.allclose(out_f32, ref, atol=1e-4, rtol=1e-4), "f32 mismatch"

    # Default bf16 MXU path (f32 accumulation): looser tolerance.
    out_bf16 = vision_embedding(image, conv_w, conv_b, pos_emb,
                                patch_size=patch_size)
    out_bf16 = jax.block_until_ready(out_bf16)
    assert out_bf16.shape == (batch, num_patches, embed_dim), out_bf16.shape
    assert jnp.allclose(out_bf16, ref, atol=2e-2, rtol=2e-2), "bf16 mismatch"

    print("KERNEL_OK")
</pallas_src>

<mosaic_0001>
module attributes {stable_mosaic.version = 11 : i64} {
  func.func @_vision_embed_kernel(%arg0: i32, %arg1: memref<32x128xf32, #tpu.memory_space<vmem>>, %arg2: memref<128x128xf32, #tpu.memory_space<vmem>>, %arg3: memref<32x128xf32, #tpu.memory_space<vmem>>, %arg4: memref<32x128xf32, #tpu.memory_space<vmem>>) attributes {dimension_semantics = [#tpu.dimension_semantics<parallel>], iteration_bounds = array<i64: 1>, scalar_prefetch = 0 : i64, scratch_operands = 0 : i64, tpu.core_type = #tpu.core_type<tc>, window_params = [{transform_indices = @transform_0, window_bounds = array<i64: 32, 128>}, {pipeline_mode = #tpu.pipeline_mode<synchronous>, transform_indices = @transform_1, window_bounds = array<i64: 128, 128>}, {pipeline_mode = #tpu.pipeline_mode<synchronous>, transform_indices = @transform_2, window_bounds = array<i64: 32, 128>}, {transform_indices = @transform_3, window_bounds = array<i64: 32, 128>}]} {
    %c0 = arith.constant 0 : index
    %c0_0 = arith.constant 0 : index
    %0 = vector.load %arg1[%c0, %c0_0] : memref<32x128xf32, #tpu.memory_space<vmem>>, vector<32x128xf32>
    %c0_1 = arith.constant 0 : index
    %c0_2 = arith.constant 0 : index
    %1 = vector.load %arg2[%c0_1, %c0_2] : memref<128x128xf32, #tpu.memory_space<vmem>>, vector<128x128xf32>
    %cst = arith.constant dense<0.000000e+00> : vector<32x128xf32>
    %2 = tpu.matmul %0, %1, %cst {dimension_numbers = #tpu.dot_dimension_numbers<[1], [0], [0], [1], [0, 0, 1, 1], [], []>} : vector<32x128xf32>, vector<128x128xf32>, vector<32x128xf32> -> vector<32x128xf32>
    %c0_3 = arith.constant 0 : index
    %c0_4 = arith.constant 0 : index
    %3 = vector.load %arg3[%c0_3, %c0_4] : memref<32x128xf32, #tpu.memory_space<vmem>>, vector<32x128xf32>
    %4 = arith.addf %2, %3 : vector<32x128xf32>
    %c0_5 = arith.constant 0 : index
    %c0_6 = arith.constant 0 : index
    %5 = vector.load %arg4[%c0_5, %c0_6] : memref<32x128xf32, #tpu.memory_space<vmem>>, vector<32x128xf32>
    tpu.vector_store %arg4[%c0_5, %c0_6], %4 {strides = array<i32>} : memref<32x128xf32, #tpu.memory_space<vmem>>, vector<32x128xf32>,
    return
  }
  func.func @transform_0(%arg0: i32) -> (i32, i32) {
    %c0_i32 = arith.constant 0 : i32
    %c0_i32_0 = arith.constant 0 : i32
    return %arg0, %c0_i32 : i32, i32
  }
  func.func @transform_1(%arg0: i32) -> (i32, i32) {
    %c0_i32 = arith.constant 0 : i32
    %c0_i32_0 = arith.constant 0 : i32
    %c0_i32_1 = arith.constant 0 : i32
    return %c0_i32, %c0_i32_0 : i32, i32
  }
  func.func @transform_2(%arg0: i32) -> (i32, i32) {
    %c0_i32 = arith.constant 0 : i32
    %c0_i32_0 = arith.constant 0 : i32
    %c0_i32_1 = arith.constant 0 : i32
    return %c0_i32, %c0_i32_0 : i32, i32
  }
  func.func @transform_3(%arg0: i32) -> (i32, i32) {
    %c0_i32 = arith.constant 0 : i32
    %c0_i32_0 = arith.constant 0 : i32
    return %arg0, %c0_i32 : i32, i32
  }
}

</mosaic_0001>

<llo_original>
// kernel: vision_embedding.1
$region0: #{vision_embedding.1}
  #allocation0 [shape = 'u32[]', space=smem, size = 0x4, offset = 0x4, fixed_abs, tag = 'smem constant byte address 0x4 - core index']
  #allocation1 [shape = 'u32[144,128]{1,0:T(1,128)}', space=vmem, size = 0x12000, scoped, tag = 'internal scratch']
  %s0 = inlined_call_operand.vmem [shape: f32[32,128], index: 0, kind: input, shape index: {}]
  %s1 = inlined_call_operand.vmem [shape: f32[128,128], index: 1, kind: input, shape index: {}]
  %s2 = inlined_call_operand.vmem [shape: f32[32,128], index: 2, kind: input, shape index: {}]
  %s3 = inlined_call_operand.hbm [shape: f32[32,128], index: 3, kind: output, shape index: {}]
  %s4 = sld [smem:[#allocation0]]
  $region22: #{vision_embedding.1} parent=0
    _
  %s6 = ssub.s32 1, %s4
  %s7 = scalar_select 0, %s6, %s4
  $region1: #{vision_embedding.1} parent=0
    #allocation2 [shape = 'u8[16384]{0}', space=vmem, size = 0x4000, scoped, tag = 'output window, operand 0, single buffered']
    #allocation3 [shape = 's32[1]{0}', space=sflag, size = 0x4, scoped, tag = 'scoped memory for vision_embedding.1']
    %8 = vsyncpa [#allocation3], 0
    // Predicated region
    $region2: #{vision_embedding.1} parent=1 // pred_check
      _
    $region3: #{vision_embedding.1} parent=1 // pred_check_branch
      %10 = sbr.rel (0) target = $region5
    $region4: #{vision_embedding.1} parent=1 // pred_region
      _
    $region5: #{vision_embedding.1} parent=1 // pred_fallthru
      _
    // Predicated region
    $region6: #{vision_embedding.1} parent=1 // pred_check
      _
    $region7: #{vision_embedding.1} parent=1 // pred_check_branch
      %12 = sbr.rel (0) target = $region9
    $region8: #{vision_embedding.1} parent=1 // pred_region
      _
    $region9: #{vision_embedding.1} parent=1 // pred_fallthru
      _
    // Predicated region
    $region10: #{vision_embedding.1} parent=1 // pred_check
      _
    $region11: #{vision_embedding.1} parent=1 // pred_check_branch
      %14 = sbr.rel (0) target = $region13
    $region12: #{vision_embedding.1} parent=1 // pred_region
      _
    $region13: #{vision_embedding.1} parent=1 // pred_fallthru
      _
    %v15 = vld [vmem:[%s0] sm:$0xff]
    %v16 = vld [vmem:[%s0 + $0x8] sm:$0xff]
    %v17 = vld [vmem:[%s0 + $0x10] sm:$0xff]
    %v18 = vld [vmem:[%s0 + $0x18] sm:$0xff]
    %v19 = vld [vmem:[%s1] sm:$0xff]
    %v20 = vld [vmem:[%s1 + $0x8] sm:$0xff]
    %v21 = vld [vmem:[%s1 + $0x10] sm:$0xff]
    %v22 = vld [vmem:[%s1 + $0x18] sm:$0xff]
    %v23 = vld [vmem:[%s1 + $0x20] sm:$0xff]
    %v24 = vld [vmem:[%s1 + $0x28] sm:$0xff]
    %v25 = vld [vmem:[%s1 + $0x30] sm:$0xff]
    %v26 = vld [vmem:[%s1 + $0x38] sm:$0xff]
    %v27 = vld [vmem:[%s1 + $0x40] sm:$0xff]
    %v28 = vld [vmem:[%s1 + $0x48] sm:$0xff]
    %v29 = vld [vmem:[%s1 + $0x50] sm:$0xff]
    %v30 = vld [vmem:[%s1 + $0x58] sm:$0xff]
    %v31 = vld [vmem:[%s1 + $0x60] sm:$0xff]
    %v32 = vld [vmem:[%s1 + $0x68] sm:$0xff]
    %v33 = vld [vmem:[%s1 + $0x70] sm:$0xff]
    %v34 = vld [vmem:[%s1 + $0x78] sm:$0xff]
    %v35 = vld [vmem:[%s2] sm:$0xff]
    %v36 = vld [vmem:[%s2 + $0x8] sm:$0xff]
    %v37 = vld [vmem:[%s2 + $0x10] sm:$0xff]
    %v38 = vld [vmem:[%s2 + $0x18] sm:$0xff]
    %39 = vmatprep.subr.mxu0 0.0
    %40 = vmatpush1.msra.mxu0 %v19
    %41 = vmatprep.subr.mxu0 0.0
    %42 = vmatpush1.msra.mxu0 %v20
    %43 = vmatprep.subr.mxu0 0.0
    %44 = vmatpush1.msra.mxu0 %v21
    %45 = vmatprep.subr.mxu0 0.0
    %46 = vmatpush1.msra.mxu0 %v22
    %47 = vmatprep.subr.mxu0 0.0
    %48 = vmatpush1.msra.mxu0 %v23
    %49 = vmatprep.subr.mxu0 0.0
    %50 = vmatpush1.msra.mxu0 %v24
    %51 = vmatprep.subr.mxu0 0.0
    %52 = vmatpush1.msra.mxu0 %v25
    %53 = vmatprep.subr.mxu0 0.0
    %54 = vmatpush1.msra.mxu0 %v26
    %55 = vmatprep.subr.mxu0 0.0
    %56 = vmatpush1.msra.mxu0 %v27
    %57 = vmatprep.subr.mxu0 0.0
    %58 = vmatpush1.msra.mxu0 %v28
    %59 = vmatprep.subr.mxu0 0.0
    %60 = vmatpush1.msra.mxu0 %v29
    %61 = vmatprep.subr.mxu0 0.0
    %62 = vmatpush1.msra.mxu0 %v30
    %63 = vmatprep.subr.mxu0 0.0
    %64 = vmatpush1.msra.mxu0 %v31
    %65 = vmatprep.subr.mxu0 0.0
    %66 = vmatpush1.msra.mxu0 %v32
    %67 = vmatprep.subr.mxu0 0.0
    %68 = vmatpush1.msra.mxu0 %v33
    %69 = vmatprep.subr.mxu0 0.0
    %70 = vmatpush1.msra.mxu0 %v34
    %71 = vmatprep.subr.mxu0 0.0
    %72 = vmatpush1.msra.mxu0 0.0
    %73 = vmatprep.subr.mxu0 0.0
    %74 = vmatpush1.msra.mxu0 0.0
    %75 = vmatprep.subr.mxu0 0.0
    %76 = vmatpush1.msra.mxu0 0.0
    %77 = vmatprep.subr.mxu0 0.0
    %78 = vmatpush1.msra.mxu0 0.0
    %79 = vmatprep.subr.mxu0 0.0
    %80 = vmatpush1.msra.mxu0 0.0
    %81 = vmatprep.subr.mxu0 0.0
    %82 = vmatpush1.msra.mxu0 0.0
    %83 = vmatprep.subr.mxu0 0.0
    %84 = vmatpush1.msra.mxu0 0.0
    %85 = vmatprep.subr.mxu0 0.0
    %86 = vmatpush1.msra.mxu0 0.0
    %87 = vmatprep.subr.mxu0 0.0
    %88 = vmatpush1.msra.mxu0 0.0
    %89 = vmatprep.subr.mxu0 0.0
    %90 = vmatpush1.msra.mxu0 0.0
    %91 = vmatprep.subr.mxu0 0.0
    %92 = vmatpush1.msra.mxu0 0.0
    %93 = vmatprep.subr.mxu0 0.0
    %94 = vmatpush1.msra.mxu0 0.0
    %95 = vmatprep.subr.mxu0 0.0
    %96 = vmatpush1.msra.mxu0 0.0
    %97 = vmatprep.subr.mxu0 0.0
    %98 = vmatpush1.msra.mxu0 0.0
    %99 = vmatprep.subr.mxu0 0.0
    %100 = vmatpush1.msra.mxu0 0.0
    %101 = vmatprep.subr.mxu0 0.0
    %102 = vmatpush1.msra.mxu0 0.0
    %103 = vmatprep.mubr.f32.mxu0 0.0
    %104 = vmatmul.mubr.f32.gmra.mrb[0].mxu0 %v15
    %v105 = vpop.f32.mrb[0].mxu0
    %v106 = vadd.f32 %v35, %v105
    %v107 = vpop.f32.mrb[0].mxu0
    %108 = vmatprep.mubr.f32.mxu0 0.0
    %109 = vmatmul.mubr.f32.gmra.mrb[0].mxu0 %v16
    %v110 = vpop.f32.mrb[0].mxu0
    %v111 = vadd.f32 %v36, %v110
    %v112 = vpop.f32.mrb[0].mxu0
    %113 = vmatprep.mubr.f32.mxu0 0.0
    %114 = vmatmul.mubr.f32.gmra.mrb[0].mxu0 %v17
    %v115 = vpop.f32.mrb[0].mxu0
    %v116 = vadd.f32 %v37, %v115
    %v117 = vpop.f32.mrb[0].mxu0
    %118 = vmatprep.mubr.f32.mxu0 0.0
    %119 = vmatmul.mubr.f32.gmra.mrb[0].mxu0 %v18
    %v120 = vpop.f32.mrb[0].mxu0
    %v121 = vadd.f32 %v38, %v120
    %v122 = vpop.f32.mrb[0].mxu0
    %123 = vdwg.mxu0
    %124 = vst [vmem:[#allocation2] sm:$0xff] %v106
    %125 = vst [vmem:[#allocation2 + $0x8] sm:$0xff] %v111
    %126 = vst [vmem:[#allocation2 + $0x10] sm:$0xff] %v116
    %127 = vst [vmem:[#allocation2 + $0x18] sm:$0xff] %v121
    // Predicated region
    $region14: #{vision_embedding.1} parent=1 // pred_check
      _
    $region15: #{vision_embedding.1} parent=1 // pred_check_branch
      %129 = sbr.rel (0) target = $region17
    $region16: #{vision_embedding.1} parent=1 // pred_region
      %s131 = ssub.s32 512, 512
      %132 = vsyncadd [#allocation3], %s131
      %s133 = sshll.u32 [#allocation2], 4
      %s134 = int_to_ptr.vmem [resolvable:$true] %s133
      %139 = dma.vmem_to_hbm [thread:$0]  %s134, 512, %s3, [#allocation3], 128, 128, 8
    $region17: #{vision_embedding.1} parent=1 // pred_fallthru
      _
    // Predicated region
    $region18: #{vision_embedding.1} parent=1 // pred_check
      _
    $region19: #{vision_embedding.1} parent=1 // pred_check_branch
      %141 = sbr.rel (0) target = $region21
    $region20: #{vision_embedding.1} parent=1 // pred_region
      %142 = dma.done [#allocation3], 512
    $region21: #{vision_embedding.1} parent=1 // pred_fallthru
      _
    %143 = vsyncpa [#allocation3], 1

</llo_original>
